<compile_context>
chip_gen: v7x
topology: tpu7x:2x2x1
jax: 0.10.0
libtpu: 0.0.40
codegen_flags: <defaults>
</compile_context>

<pallas_src>
import functools

import jax
import jax.numpy as jnp
from jax.experimental import pallas as pl
from jax.experimental.pallas import tpu as pltpu


def _binarize_kernel(x_ref, e_ref, thr_ref, out_ref, *, disc, cont, n, use_not):
    """Fused binarization tile.

    x_ref   : (TB, disc + cont)          input features (native dtype)
    e_ref   : (cont, 2*cont*n)           resident 0/1 expansion matrix [E | E]
    thr_ref : (1, 2*cont*n)              resident fused thresholds [cl.T | cr.T]
    out_ref : (TB, disc_eff + 2*cont*n)  fused output (f32)
    """
    cn = cont * n
    disc_eff = 2 * disc if use_not else disc

    x = x_ref[...].astype(jnp.float32)            # per-tile upcast, hidden by DMA
    x_cont = x[:, disc:disc + cont]               # (TB, C)

    # One MXU matmul replaces the per-feature broadcast+concat replication.
    # HIGHEST precision => exact reconstruction of the f32 values through the
    # 0/1 matrix, so the compares below are bit-identical to the reference.
    x_rep2 = jnp.dot(x_cont, e_ref[...],
                     preferred_element_type=jnp.float32,
                     precision=jax.lax.Precision.HIGHEST)   # (TB, 2*C*n)

    diff = x_rep2 - thr_ref[...]                  # (TB, 2*C*n)
    b = (diff > 0).astype(jnp.float32)            # Binarize(diff); NaN -> 0

    # First cn lanes: Binarize(x - cl.T).  Last cn lanes: 1 - Binarize(x - cr.T)
    # (keeps NaN -> 1.0 exactly like the torch reference).
    col = jax.lax.broadcasted_iota(jnp.int32, b.shape, 1)
    bin_out = jnp.where(col < cn, b, 1.0 - b)

    if disc > 0:
        x_disc = x[:, :disc]
        out_ref[:, :disc] = x_disc.astype(out_ref.dtype)
        if use_not:
            out_ref[:, disc:disc_eff] = (1.0 - x_disc).astype(out_ref.dtype)
    out_ref[:, disc_eff:] = bin_out.astype(out_ref.dtype)


def _vmem_budget_bytes():
    """Generation-aware pipeline budget (v5e/v6e: 128 MiB VMEM, v7x: 64 MiB)."""
    try:
        cap = pltpu.get_tpu_info().vmem_capacity_bytes
    except Exception:
        cap = 64 * 1024 * 1024                    # assume the smallest (v7x)
    return max(8 * 1024 * 1024, min(24 * 1024 * 1024, cap // 5))


def _pick_block_b(batch, feat_in, out_dim, cn):
    """Largest batch tile (multiple of 8) whose double-buffered blocks plus
    in-kernel temporaries fit the per-generation VMEM budget, while keeping
    >= 2 grid steps for batch > 16 so both v7x TensorCores get work."""
    if batch <= 16:
        return batch                              # single full tile
    bytes_per_row = (2 * 4 * (feat_in + out_dim)          # double-buffered blocks
                     + 4 * (feat_in + 3 * 2 * cn))        # x_f32, x_rep2, diff/b, bin_out
    tb = (_vmem_budget_bytes() // max(bytes_per_row, 1)) // 8 * 8
    tb = max(8, min(32 * 1024, tb))
    half = max(8, (-(-batch // 2)) // 8 * 8)      # guarantees >= 2 grid steps
    return min(tb, half)


@functools.partial(jax.jit, static_argnames=("disc", "cont", "n", "use_not"))
def _binarize_forward(x, e_mat, thr, *, disc, cont, n, use_not):
    batch, feat_in = x.shape
    cn = cont * n
    disc_eff = 2 * disc if use_not else disc
    out_dim = disc_eff + 2 * cn
    tb = _pick_block_b(batch, feat_in, out_dim, cn)

    kernel = functools.partial(
        _binarize_kernel, disc=disc, cont=cont, n=n, use_not=use_not)

    return pl.pallas_call(
        kernel,
        out_shape=jax.ShapeDtypeStruct((batch, out_dim), jnp.float32),
        grid=(pl.cdiv(batch, tb),),
        in_specs=[
            pl.BlockSpec((tb, feat_in), lambda i: (i, 0)),     # batch-tiled x
            pl.BlockSpec((cont, 2 * cn), lambda i: (0, 0)),    # resident [E|E]
            pl.BlockSpec((1, 2 * cn), lambda i: (0, 0)),       # resident [cl|cr]
        ],
        out_specs=pl.BlockSpec((tb, out_dim), lambda i: (i, 0)),
        compiler_params=pltpu.CompilerParams(
            dimension_semantics=("parallel",),                 # 2 TCs on v7x
            vmem_limit_bytes=32 * 1024 * 1024),
    )(x, e_mat, thr)


class BinarizeLayerPallas:
    """JAX/Pallas port of rrl.components.BinarizeLayer (forward only)."""

    def __init__(self, n, input_dim, use_not=False, key=None):
        self.n = n
        self.input_dim = input_dim            # (disc_num, cont_num)
        self.disc_num = input_dim[0]
        self.use_not = use_not
        if self.use_not:
            self.disc_num *= 2
        self.output_dim = self.disc_num + self.n * self.input_dim[1] * 2

        cont = self.input_dim[1]
        if cont > 0:
            if key is None:
                key = jax.random.PRNGKey(42)
            k_cl, k_cr = jax.random.split(key)
            # Deterministic analogue of 3.0 * (2.0 * torch.rand(n, cont) - 1.0)
            self.cl = 3.0 * (2.0 * jax.random.uniform(
                k_cl, (self.n, cont), dtype=jnp.float32) - 1.0)
            self.cr = 3.0 * (2.0 * jax.random.uniform(
                k_cr, (self.n, cont), dtype=jnp.float32) - 1.0)
            cn = cont * self.n
            # Fused thresholds row [cl.T | cr.T] in torch .view(B, -1) column
            # order (c*n + j), built once at init (no per-call transpose).
            self.thr = jnp.concatenate(
                (self.cl.T.reshape(1, cn), self.cr.T.reshape(1, cn)), axis=1)
            # 0/1 expansion matrix [E | E]: E[c, c*n + j] = 1.
            e = jnp.repeat(jnp.eye(cont, dtype=jnp.float32), self.n, axis=1)
            self.e2 = jnp.concatenate((e, e), axis=1)          # (cont, 2*cn)
        else:
            self.cl = self.cr = self.thr = self.e2 = None

    def __call__(self, x):
        x = jnp.asarray(x)                    # keep native dtype; upcast in-kernel
        if self.input_dim[1] > 0:
            return _binarize_forward(
                x, self.e2, self.thr,
                disc=self.input_dim[0], cont=self.input_dim[1],
                n=self.n, use_not=self.use_not)
        if self.use_not:
            x = jnp.concatenate((x, 1.0 - x), axis=1)
        return x

    def reference(self, x):
        """Pure-JAX reference mirroring the PyTorch forward exactly."""
        disc = self.input_dim[0]
        if self.input_dim[1] > 0:
            x = jnp.asarray(x, jnp.float32)
            x_disc = x[:, :disc]
            x_cont = x[:, disc:]
            if self.use_not:
                x_disc = jnp.concatenate((x_disc, 1.0 - x_disc), axis=1)
            xe = x_cont[:, :, None]                         # (B, C, 1)
            bl = jnp.where(xe - self.cl.T[None] > 0, 1.0, 0.0)
            br = jnp.where(xe - self.cr.T[None] > 0, 1.0, 0.0)
            batch = x.shape[0]
            return jnp.concatenate(
                (x_disc, bl.reshape(batch, -1), 1.0 - br.reshape(batch, -1)),
                axis=1)
        if self.use_not:
            x = jnp.concatenate((x, 1.0 - x), axis=1)
        return x


if __name__ == "__main__":
    key = jax.random.PRNGKey(0)
    k_disc, k_cont, k_p1, k_x2, k_p2 = jax.random.split(key, 5)

    # Config 1: disc_num=4, cont_num=6, n=3, use_not=True, B=8.
    B1, disc1, cont1, n1 = 8, 4, 6, 3
    x_disc = jax.random.uniform(k_disc, (B1, disc1), dtype=jnp.float32)
    x_cont = jax.random.normal(k_cont, (B1, cont1), dtype=jnp.float32)
    x1 = jnp.concatenate((x_disc, x_cont), axis=1)          # (8, 10)

    layer1 = BinarizeLayerPallas(n1, (disc1, cont1), use_not=True, key=k_p1)
    out1 = jax.block_until_ready(layer1(x1))
    assert out1.shape == (B1, layer1.output_dim), (out1.shape, layer1.output_dim)
    ref1 = layer1.reference(x1)
    assert jnp.array_equal(out1, ref1), "config-1 mismatch vs reference"

    # Config 2: continuous-only (disc_num=0), cont_num=5, n=4, use_not=False.
    B2, cont2, n2 = 16, 5, 4
    x2 = jax.random.normal(k_x2, (B2, cont2), dtype=jnp.float32)   # (16, 5)
    layer2 = BinarizeLayerPallas(n2, (0, cont2), use_not=False, key=k_p2)
    out2 = jax.block_until_ready(layer2(x2))
    assert out2.shape == (B2, layer2.output_dim), (out2.shape, layer2.output_dim)
    ref2 = layer2.reference(x2)
    assert jnp.array_equal(out2, ref2), "config-2 mismatch vs reference"

    print("KERNEL_OK")
</pallas_src>

<mosaic_0001>
module attributes {stable_mosaic.version = 11 : i64} {
  func.func @_binarize_kernel(%arg0: i32, %arg1: memref<8x10xf32, #tpu.memory_space<vmem>>, %arg2: memref<6x36xf32, #tpu.memory_space<vmem>>, %arg3: memref<1x36xf32, #tpu.memory_space<vmem>>, %arg4: memref<8x44xf32, #tpu.memory_space<vmem>>) attributes {dimension_semantics = [#tpu.dimension_semantics<parallel>], iteration_bounds = array<i64: 1>, scalar_prefetch = 0 : i64, scratch_operands = 0 : i64, tpu.core_type = #tpu.core_type<tc>, window_params = [{transform_indices = @transform_0, window_bounds = array<i64: 8, 10>}, {pipeline_mode = #tpu.pipeline_mode<synchronous>, transform_indices = @transform_1, window_bounds = array<i64: 6, 36>}, {pipeline_mode = #tpu.pipeline_mode<synchronous>, transform_indices = @transform_2, window_bounds = array<i64: 1, 36>}, {transform_indices = @transform_3, window_bounds = array<i64: 8, 44>}]} {
    %c0 = arith.constant 0 : index
    %c0_0 = arith.constant 0 : index
    %0 = vector.load %arg1[%c0, %c0_0] : memref<8x10xf32, #tpu.memory_space<vmem>>, vector<8x10xf32>
    %1 = vector.extract_strided_slice %0 {offsets = [0, 4], sizes = [8, 6], strides = [1, 1]} : vector<8x10xf32> to vector<8x6xf32>
    %c0_1 = arith.constant 0 : index
    %c0_2 = arith.constant 0 : index
    %2 = vector.load %arg2[%c0_1, %c0_2] : memref<6x36xf32, #tpu.memory_space<vmem>>, vector<6x36xf32>
    %cst = arith.constant dense<0.000000e+00> : vector<8x36xf32>
    %3 = tpu.matmul %1, %2, %cst {dimension_numbers = #tpu.dot_dimension_numbers<[1], [0], [0], [1], [0, 0, 1, 1], [], []>, precision = #tpu.contract_precision<fp32>} : vector<8x6xf32>, vector<6x36xf32>, vector<8x36xf32> -> vector<8x36xf32>
    %c0_3 = arith.constant 0 : index
    %c0_4 = arith.constant 0 : index
    %4 = vector.load %arg3[%c0_3, %c0_4] : memref<1x36xf32, #tpu.memory_space<vmem>>, vector<1x36xf32>
    %5 = vector.broadcast %4 : vector<1x36xf32> to vector<8x36xf32>
    %6 = arith.subf %3, %5 : vector<8x36xf32>
    %cst_5 = arith.constant 0.000000e+00 : f32
    %7 = vector.broadcast %cst_5 : f32 to vector<8x36xf32>
    %8 = arith.cmpf ogt, %6, %7 : vector<8x36xf32>
    %9 = arith.extui %8 : vector<8x36xi1> to vector<8x36xi32>
    %10 = arith.sitofp %9 : vector<8x36xi32> to vector<8x36xf32>
    %11 = tpu.iota {dimensions = array<i32: 1>} : vector<8x36xi32>
    %c18_i32 = arith.constant 18 : i32
    %12 = vector.broadcast %c18_i32 : i32 to vector<8x36xi32>
    %13 = arith.cmpi slt, %11, %12 : vector<8x36xi32>
    %cst_6 = arith.constant 1.000000e+00 : f32
    %14 = vector.broadcast %cst_6 : f32 to vector<8x36xf32>
    %15 = arith.subf %14, %10 : vector<8x36xf32>
    %16 = arith.select %13, %10, %15 : vector<8x36xi1>, vector<8x36xf32>
    %17 = vector.extract_strided_slice %0 {offsets = [0, 0], sizes = [8, 4], strides = [1, 1]} : vector<8x10xf32> to vector<8x4xf32>
    %c0_7 = arith.constant 0 : index
    %c0_8 = arith.constant 0 : index
    %18 = vector.load %arg4[%c0_7, %c0_8] : memref<8x44xf32, #tpu.memory_space<vmem>>, vector<8x4xf32>
    tpu.vector_store %arg4[%c0_7, %c0_8], %17 {strides = array<i32>} : memref<8x44xf32, #tpu.memory_space<vmem>>, vector<8x4xf32>,
    %cst_9 = arith.constant 1.000000e+00 : f32
    %19 = vector.broadcast %cst_9 : f32 to vector<8x4xf32>
    %20 = arith.subf %19, %17 : vector<8x4xf32>
    %c0_10 = arith.constant 0 : index
    %c4 = arith.constant 4 : index
    %21 = vector.load %arg4[%c0_10, %c4] : memref<8x44xf32, #tpu.memory_space<vmem>>, vector<8x4xf32>
    tpu.vector_store %arg4[%c0_10, %c4], %20 {strides = array<i32>} : memref<8x44xf32, #tpu.memory_space<vmem>>, vector<8x4xf32>,
    %c0_11 = arith.constant 0 : index
    %c8 = arith.constant 8 : index
    %22 = vector.load %arg4[%c0_11, %c8] : memref<8x44xf32, #tpu.memory_space<vmem>>, vector<8x36xf32>
    tpu.vector_store %arg4[%c0_11, %c8], %16 {strides = array<i32>} : memref<8x44xf32, #tpu.memory_space<vmem>>, vector<8x36xf32>,
    return
  }
  func.func @transform_0(%arg0: i32) -> (i32, i32) {
    %c0_i32 = arith.constant 0 : i32
    %c0_i32_0 = arith.constant 0 : i32
    return %arg0, %c0_i32 : i32, i32
  }
  func.func @transform_1(%arg0: i32) -> (i32, i32) {
    %c0_i32 = arith.constant 0 : i32
    %c0_i32_0 = arith.constant 0 : i32
    %c0_i32_1 = arith.constant 0 : i32
    return %c0_i32, %c0_i32_0 : i32, i32
  }
  func.func @transform_2(%arg0: i32) -> (i32, i32) {
    %c0_i32 = arith.constant 0 : i32
    %c0_i32_0 = arith.constant 0 : i32
    %c0_i32_1 = arith.constant 0 : i32
    return %c0_i32, %c0_i32_0 : i32, i32
  }
  func.func @transform_3(%arg0: i32) -> (i32, i32) {
    %c0_i32 = arith.constant 0 : i32
    %c0_i32_0 = arith.constant 0 : i32
    return %arg0, %c0_i32 : i32, i32
  }
}

</mosaic_0001>

<llo_original>
// kernel: _binarize_forward.1
$region0: #{_binarize_forward.1}
  #allocation0 [shape = 'u32[]', space=smem, size = 0x4, offset = 0x4, fixed_abs, tag = 'smem constant byte address 0x4 - core index']
  #allocation1 [shape = 'u32[144,128]{1,0:T(1,128)}', space=vmem, size = 0x12000, scoped, tag = 'internal scratch']
  %s0 = inlined_call_operand.hbm [shape: f32[8,10], index: 0, kind: input, shape index: {}]
  %s1 = inlined_call_operand.hbm [shape: f32[6,36], index: 1, kind: input, shape index: {}]
  %s2 = inlined_call_operand.vmem [shape: f32[1,36], index: 2, kind: input, shape index: {}]
  %s3 = inlined_call_operand.hbm [shape: f32[8,44], index: 3, kind: output, shape index: {}]
  %s4 = sld [smem:[#allocation0]]
  $region30: #{_binarize_forward.1} parent=0
    _
  %s6 = ssub.s32 1, %s4
  %s7 = scalar_select 0, %s6, %s4
  $region1: #{_binarize_forward.1} parent=0
    #allocation2 [shape = 'u8[4096]{0}', space=vmem, size = 0x1000, scoped, tag = 'input window, operand 0, single buffered']
    #allocation3 [shape = 's32[1]{0}', space=sflag, size = 0x4, scoped, tag = 'scoped memory for _binarize_forward.1']
    #allocation4 [shape = 's32[1]{0}', space=sflag, size = 0x4, scoped, tag = 'scoped memory for _binarize_forward.1']
    #allocation5 [shape = 'u8[4096]{0}', space=vmem, size = 0x1000, scoped, tag = 'input window, operand 1, single buffered']
    #allocation6 [shape = 's32[1]{0}', space=sflag, size = 0x4, scoped, tag = 'scoped memory for _binarize_forward.1']
    #allocation7 [shape = 'u8[4096]{0}', space=vmem, size = 0x1000, scoped, tag = 'output window, operand 0, single buffered']
    %8 = vsyncpa [#allocation3], 0
    %9 = vsyncpa [#allocation6], 0
    %10 = vsyncpa [#allocation4], 0
    // Predicated region
    $region2: #{_binarize_forward.1} parent=1 // pred_check
      _
    $region3: #{_binarize_forward.1} parent=1 // pred_check_branch
      %12 = sbr.rel (0) target = $region5
    $region4: #{_binarize_forward.1} parent=1 // pred_region
      %s14 = ssub.s32 128, 128
      %15 = vsyncadd [#allocation3], %s14
      %s17 = sshll.u32 [#allocation2], 4
      %s18 = int_to_ptr.vmem [resolvable:$true] %s17
      %20 = dma.hbm_to_vmem [thread:$0]  %s0, 128, %s18, [#allocation3]
    $region5: #{_binarize_forward.1} parent=1 // pred_fallthru
      _
    // Predicated region
    $region6: #{_binarize_forward.1} parent=1 // pred_check
      _
    $region7: #{_binarize_forward.1} parent=1 // pred_check_branch
      %22 = sbr.rel (0) target = $region9
    $region8: #{_binarize_forward.1} parent=1 // pred_region
      %s24 = ssub.s32 128, 128
      %25 = vsyncadd [#allocation6], %s24
      %s27 = sshll.u32 [#allocation5], 4
      %s28 = int_to_ptr.vmem [resolvable:$true] %s27
      %30 = dma.hbm_to_vmem [thread:$0]  %s1, 128, %s28, [#allocation6]
    $region9: #{_binarize_forward.1} parent=1 // pred_fallthru
      _
    // Predicated region
    $region10: #{_binarize_forward.1} parent=1 // pred_check
      _
    $region11: #{_binarize_forward.1} parent=1 // pred_check_branch
      %32 = sbr.rel (0) target = $region13
    $region12: #{_binarize_forward.1} parent=1 // pred_region
      _
    $region13: #{_binarize_forward.1} parent=1 // pred_fallthru
      _
    // Predicated region
    $region14: #{_binarize_forward.1} parent=1 // pred_check
      _
    $region15: #{_binarize_forward.1} parent=1 // pred_check_branch
      %34 = sbr.rel (0) target = $region17
    $region16: #{_binarize_forward.1} parent=1 // pred_region
      %35 = dma.done [#allocation3], 128
    $region17: #{_binarize_forward.1} parent=1 // pred_fallthru
      _
    // Predicated region
    $region18: #{_binarize_forward.1} parent=1 // pred_check
      _
    $region19: #{_binarize_forward.1} parent=1 // pred_check_branch
      %37 = sbr.rel (0) target = $region21
    $region20: #{_binarize_forward.1} parent=1 // pred_region
      %38 = dma.done [#allocation6], 128
    $region21: #{_binarize_forward.1} parent=1 // pred_fallthru
      _
    %v39 = vld [vmem:[#allocation2] sm:$0xff]
    %v40 = vld [vmem:[#allocation5] sm:$0x3f]
    %42 = vrot.lane.b32.xlu0 %v39, 124
    %v43 = vpop.permute.xlu0 %42
    %vm44 = vcmask 48128
    %v45 = vsel %vm44, %v43, 0
    %vm47 = vcmask 1045504
    %v49 = vsel %vm47, %v40, 0
    %51 = vmatprep.subr.mxu0 0.0
    %v52 = vand.u32 %v49, 4294901760
    %53 = vmatpush1.msra.mxu0 %v52
    %54 = vmatprep.subr.mxu0 0.0
    %55 = vmatpush1.msra.mxu0 0.0
    %56 = vmatprep.subr.mxu0 0.0
    %57 = vmatpush1.msra.mxu0 0.0
    %58 = vmatprep.subr.mxu0 0.0
    %59 = vmatpush1.msra.mxu0 0.0
    %60 = vmatprep.subr.mxu0 0.0
    %61 = vmatpush1.msra.mxu0 0.0
    %62 = vmatprep.subr.mxu0 0.0
    %63 = vmatpush1.msra.mxu0 0.0
    %64 = vmatprep.subr.mxu0 0.0
    %65 = vmatpush1.msra.mxu0 0.0
    %66 = vmatprep.subr.mxu0 0.0
    %67 = vmatpush1.msra.mxu0 0.0
    %68 = vmatprep.subr.mxu0 0.0
    %69 = vmatpush1.msra.mxu0 0.0
    %70 = vmatprep.subr.mxu0 0.0
    %71 = vmatpush1.msra.mxu0 0.0
    %72 = vmatprep.subr.mxu0 0.0
    %73 = vmatpush1.msra.mxu0 0.0
    %74 = vmatprep.subr.mxu0 0.0
    %75 = vmatpush1.msra.mxu0 0.0
    %76 = vmatprep.subr.mxu0 0.0
    %77 = vmatpush1.msra.mxu0 0.0
    %78 = vmatprep.subr.mxu0 0.0
    %79 = vmatpush1.msra.mxu0 0.0
    %80 = vmatprep.subr.mxu0 0.0
    %81 = vmatpush1.msra.mxu0 0.0
    %82 = vmatprep.subr.mxu0 0.0
    %83 = vmatpush1.msra.mxu0 0.0
    %84 = vmatprep.subr.mxu0 0.0
    %85 = vmatpush1.msra.mxu0 0.0
    %86 = vmatprep.subr.mxu0 0.0
    %87 = vmatpush1.msra.mxu0 0.0
    %88 = vmatprep.subr.mxu0 0.0
    %89 = vmatpush1.msra.mxu0 0.0
    %90 = vmatprep.subr.mxu0 0.0
    %91 = vmatpush1.msra.mxu0 0.0
    %92 = vmatprep.subr.mxu0 0.0
    %93 = vmatpush1.msra.mxu0 0.0
    %94 = vmatprep.subr.mxu0 0.0
    %95 = vmatpush1.msra.mxu0 0.0
    %96 = vmatprep.subr.mxu0 0.0
    %97 = vmatpush1.msra.mxu0 0.0
    %98 = vmatprep.subr.mxu0 0.0
    %99 = vmatpush1.msra.mxu0 0.0
    %100 = vmatprep.subr.mxu0 0.0
    %101 = vmatpush1.msra.mxu0 0.0
    %102 = vmatprep.subr.mxu0 0.0
    %103 = vmatpush1.msra.mxu0 0.0
    %104 = vmatprep.subr.mxu0 0.0
    %105 = vmatpush1.msra.mxu0 0.0
    %106 = vmatprep.subr.mxu0 0.0
    %107 = vmatpush1.msra.mxu0 0.0
    %108 = vmatprep.subr.mxu0 0.0
    %109 = vmatpush1.msra.mxu0 0.0
    %110 = vmatprep.subr.mxu0 0.0
    %111 = vmatpush1.msra.mxu0 0.0
    %112 = vmatprep.subr.mxu0 0.0
    %113 = vmatpush1.msra.mxu0 0.0
    %114 = vmatprep.subr.mxu0 0.0
    %115 = vmatpush1.msra.mxu0 0.0
    %116 = vmatprep.mubr.f32.mxu0 0.0
    %v117 = vand.u32 %v45, 4294901760
    %v118 = vsub.f32 %v45, %v117
    %v119 = vand.u32 %v118, 4294901760
    %v120 = vsub.f32 %v118, %v119
    %v121 = vand.u32 %v120, 4294901760
    %122 = vmatmul.mubr.f32.gmra.mrb[0].mxu0 %v121
    %v123 = vpop.f32.mrb[0].mxu0
    %v124 = vadd.f32 0.0, %v123
    %v125 = vpop.f32.mrb[0].mxu0
    %126 = vdwg.mxu0
    %127 = vmatprep.subr.mxu0 0.0
    %v128 = vand.u32 %v49, 4294901760
    %v129 = vsub.f32 %v49, %v128
    %v130 = vand.u32 %v129, 4294901760
    %v131 = vsub.f32 %v129, %v130
    %v132 = vand.u32 %v131, 4294901760
    %133 = vmatpush1.msra.mxu0 %v132
    %134 = vmatprep.subr.mxu0 0.0
    %135 = vmatpush1.msra.mxu0 0.0
    %136 = vmatprep.subr.mxu0 0.0
    %137 = vmatpush1.msra.mxu0 0.0
    %138 = vmatprep.subr.mxu0 0.0
    %139 = vmatpush1.msra.mxu0 0.0
    %140 = vmatprep.subr.mxu0 0.0
    %141 = vmatpush1.msra.mxu0 0.0
    %142 = vmatprep.subr.mxu0 0.0
    %143 = vmatpush1.msra.mxu0 0.0
    %144 = vmatprep.subr.mxu0 0.0
    %145 = vmatpush1.msra.mxu0 0.0
    %146 = vmatprep.subr.mxu0 0.0
    %147 = vmatpush1.msra.mxu0 0.0
    %148 = vmatprep.subr.mxu0 0.0
    %149 = vmatpush1.msra.mxu0 0.0
    %150 = vmatprep.subr.mxu0 0.0
    %151 = vmatpush1.msra.mxu0 0.0
    %152 = vmatprep.subr.mxu0 0.0
    %153 = vmatpush1.msra.mxu0 0.0
    %154 = vmatprep.subr.mxu0 0.0
    %155 = vmatpush1.msra.mxu0 0.0
    %156 = vmatprep.subr.mxu0 0.0
    %157 = vmatpush1.msra.mxu0 0.0
    %158 = vmatprep.subr.mxu0 0.0
    %159 = vmatpush1.msra.mxu0 0.0
    %160 = vmatprep.subr.mxu0 0.0
    %161 = vmatpush1.msra.mxu0 0.0
    %162 = vmatprep.subr.mxu0 0.0
    %163 = vmatpush1.msra.mxu0 0.0
    %164 = vmatprep.subr.mxu0 0.0
    %165 = vmatpush1.msra.mxu0 0.0
    %166 = vmatprep.subr.mxu0 0.0
    %167 = vmatpush1.msra.mxu0 0.0
    %168 = vmatprep.subr.mxu0 0.0
    %169 = vmatpush1.msra.mxu0 0.0
    %170 = vmatprep.subr.mxu0 0.0
    %171 = vmatpush1.msra.mxu0 0.0
    %172 = vmatprep.subr.mxu0 0.0
    %173 = vmatpush1.msra.mxu0 0.0
    %174 = vmatprep.subr.mxu0 0.0
    %175 = vmatpush1.msra.mxu0 0.0
    %176 = vmatprep.subr.mxu0 0.0
    %177 = vmatpush1.msra.mxu0 0.0
    %178 = vmatprep.subr.mxu0 0.0
    %179 = vmatpush1.msra.mxu0 0.0
    %180 = vmatprep.subr.mxu0 0.0
    %181 = vmatpush1.msra.mxu0 0.0
    %182 = vmatprep.subr.mxu0 0.0
    %183 = vmatpush1.msra.mxu0 0.0
    %184 = vmatprep.subr.mxu0 0.0
    %185 = vmatpush1.msra.mxu0 0.0
    %186 = vmatprep.subr.mxu0 0.0
    %187 = vmatpush1.msra.mxu0 0.0
    %188 = vmatprep.subr.mxu0 0.0
    %189 = vmatpush1.msra.mxu0 0.0
    %190 = vmatprep.subr.mxu0 0.0
    %191 = vmatpush1.msra.mxu0 0.0
    %192 = vmatprep.subr.mxu0 0.0
    %193 = vmatpush1.msra.mxu0 0.0
    %194 = vmatprep.subr.mxu0 0.0
    %195 = vmatpush1.msra.mxu0 0.0
    %196 = vmatprep.mubr.f32.mxu0 0.0
    %v197 = vand.u32 %v45, 4294901760
    %198 = vmatmul.mubr.f32.gmra.mrb[0].mxu0 %v197
    %v199 = vpop.f32.mrb[0].mxu0
    %v200 = vadd.f32 %v124, %v199
    %v201 = vpop.f32.mrb[0].mxu0
    %202 = vdwg.mxu0
    %203 = vmatprep.subr.mxu0 0.0
    %v204 = vand.u32 %v49, 4294901760
    %v205 = vsub.f32 %v49, %v204
    %206 = vmatpush1.msra.mxu0 %v205
    %207 = vmatprep.subr.mxu0 0.0
    %208 = vmatpush1.msra.mxu0 0.0
    %209 = vmatprep.subr.mxu0 0.0
    %210 = vmatpush1.msra.mxu0 0.0
    %211 = vmatprep.subr.mxu0 0.0
    %212 = vmatpush1.msra.mxu0 0.0
    %213 = vmatprep.subr.mxu0 0.0
    %214 = vmatpush1.msra.mxu0 0.0
    %215 = vmatprep.subr.mxu0 0.0
    %216 = vmatpush1.msra.mxu0 0.0
    %217 = vmatprep.subr.mxu0 0.0
    %218 = vmatpush1.msra.mxu0 0.0
    %219 = vmatprep.subr.mxu0 0.0
    %220 = vmatpush1.msra.mxu0 0.0
    %221 = vmatprep.subr.mxu0 0.0
    %222 = vmatpush1.msra.mxu0 0.0
    %223 = vmatprep.subr.mxu0 0.0
    %224 = vmatpush1.msra.mxu0 0.0
    %225 = vmatprep.subr.mxu0 0.0
    %226 = vmatpush1.msra.mxu0 0.0
    %227 = vmatprep.subr.mxu0 0.0
    %228 = vmatpush1.msra.mxu0 0.0
    %229 = vmatprep.subr.mxu0 0.0
    %230 = vmatpush1.msra.mxu0 0.0
    %231 = vmatprep.subr.mxu0 0.0
    %232 = vmatpush1.msra.mxu0 0.0
    %233 = vmatprep.subr.mxu0 0.0
    %234 = vmatpush1.msra.mxu0 0.0
    %235 = vmatprep.subr.mxu0 0.0
    %236 = vmatpush1.msra.mxu0 0.0
    %237 = vmatprep.subr.mxu0 0.0
    %238 = vmatpush1.msra.mxu0 0.0
    %239 = vmatprep.subr.mxu0 0.0
    %240 = vmatpush1.msra.mxu0 0.0
    %241 = vmatprep.subr.mxu0 0.0
    %242 = vmatpush1.msra.mxu0 0.0
    %243 = vmatprep.subr.mxu0 0.0
    %244 = vmatpush1.msra.mxu0 0.0
    %245 = vmatprep.subr.mxu0 0.0
    %246 = vmatpush1.msra.mxu0 0.0
    %247 = vmatprep.subr.mxu0 0.0
    %248 = vmatpush1.msra.mxu0 0.0
    %249 = vmatprep.subr.mxu0 0.0
    %250 = vmatpush1.msra.mxu0 0.0
    %251 = vmatprep.subr.mxu0 0.0
    %252 = vmatpush1.msra.mxu0 0.0
    %253 = vmatprep.subr.mxu0 0.0
    %254 = vmatpush1.msra.mxu0 0.0
    %255 = vmatprep.subr.mxu0 0.0
    %256 = vmatpush1.msra.mxu0 0.0
    %257 = vmatprep.subr.mxu0 0.0
    %258 = vmatpush1.msra.mxu0 0.0
    %259 = vmatprep.subr.mxu0 0.0
    %260 = vmatpush1.msra.mxu0 0.0
    %261 = vmatprep.subr.mxu0 0.0
    %262 = vmatpush1.msra.mxu0 0.0
    %263 = vmatprep.subr.mxu0 0.0
    %264 = vmatpush1.msra.mxu0 0.0
    %265 = vmatprep.subr.mxu0 0.0
    %266 = vmatpush1.msra.mxu0 0.0
    %267 = vmatprep.subr.mxu0 0.0
    %268 = vmatpush1.msra.mxu0 0.0
    %269 = vmatprep.mubr.f32.mxu0 0.0
    %v270 = vand.u32 %v45, 4294901760
    %v271 = vsub.f32 %v45, %v270
    %272 = vmatmul.mubr.f32.gmra.mrb[0].mxu0 %v271
    %v273 = vpop.f32.mrb[0].mxu0
    %v274 = vadd.f32 %v200, %v273
    %v275 = vpop.f32.mrb[0].mxu0
    %276 = vdwg.mxu0
    %277 = vmatprep.subr.mxu0 0.0
    %v278 = vand.u32 %v49, 4294901760
    %279 = vmatpush1.msra.mxu0 %v278
    %280 = vmatprep.subr.mxu0 0.0
    %281 = vmatpush1.msra.mxu0 0.0
    %282 = vmatprep.subr.mxu0 0.0
    %283 = vmatpush1.msra.mxu0 0.0
    %284 = vmatprep.subr.mxu0 0.0
    %285 = vmatpush1.msra.mxu0 0.0
    %286 = vmatprep.subr.mxu0 0.0
    %287 = vmatpush1.msra.mxu0 0.0
    %288 = vmatprep.subr.mxu0 0.0
    %289 = vmatpush1.msra.mxu0 0.0
    %290 = vmatprep.subr.mxu0 0.0
    %291 = vmatpush1.msra.mxu0 0.0
    %292 = vmatprep.subr.mxu0 0.0
    %293 = vmatpush1.msra.mxu0 0.0
    %294 = vmatprep.subr.mxu0 0.0
    %295 = vmatpush1.msra.mxu0 0.0
    %296 = vmatprep.subr.mxu0 0.0
    %297 = vmatpush1.msra.mxu0 0.0
    %298 = vmatprep.subr.mxu0 0.0
    %299 = vmatpush1.msra.mxu0 0.0
    %300 = vmatprep.subr.mxu0 0.0
    %301 = vmatpush1.msra.mxu0 0.0
    %302 = vmatprep.subr.mxu0 0.0
    %303 = vmatpush1.msra.mxu0 0.0
    %304 = vmatprep.subr.mxu0 0.0
    %305 = vmatpush1.msra.mxu0 0.0
    %306 = vmatprep.subr.mxu0 0.0
    %307 = vmatpush1.msra.mxu0 0.0
    %308 = vmatprep.subr.mxu0 0.0
    %309 = vmatpush1.msra.mxu0 0.0
    %310 = vmatprep.subr.mxu0 0.0
    %311 = vmatpush1.msra.mxu0 0.0
    %312 = vmatprep.subr.mxu0 0.0
    %313 = vmatpush1.msra.mxu0 0.0
    %314 = vmatprep.subr.mxu0 0.0
    %315 = vmatpush1.msra.mxu0 0.0
    %316 = vmatprep.subr.mxu0 0.0
    %317 = vmatpush1.msra.mxu0 0.0
    %318 = vmatprep.subr.mxu0 0.0
    %319 = vmatpush1.msra.mxu0 0.0
    %320 = vmatprep.subr.mxu0 0.0
    %321 = vmatpush1.msra.mxu0 0.0
    %322 = vmatprep.subr.mxu0 0.0
    %323 = vmatpush1.msra.mxu0 0.0
    %324 = vmatprep.subr.mxu0 0.0
    %325 = vmatpush1.msra.mxu0 0.0
    %326 = vmatprep.subr.mxu0 0.0
    %327 = vmatpush1.msra.mxu0 0.0
    %328 = vmatprep.subr.mxu0 0.0
    %329 = vmatpush1.msra.mxu0 0.0
    %330 = vmatprep.subr.mxu0 0.0
    %331 = vmatpush1.msra.mxu0 0.0
    %332 = vmatprep.subr.mxu0 0.0
    %333 = vmatpush1.msra.mxu0 0.0
    %334 = vmatprep.subr.mxu0 0.0
    %335 = vmatpush1.msra.mxu0 0.0
    %336 = vmatprep.subr.mxu0 0.0
    %337 = vmatpush1.msra.mxu0 0.0
    %338 = vmatprep.subr.mxu0 0.0
    %339 = vmatpush1.msra.mxu0 0.0
    %340 = vmatprep.subr.mxu0 0.0
    %341 = vmatpush1.msra.mxu0 0.0
    %342 = vmatprep.mubr.f32.mxu0 0.0
    %v343 = vand.u32 %v45, 4294901760
    %v344 = vsub.f32 %v45, %v343
    %v345 = vand.u32 %v344, 4294901760
    %346 = vmatmul.mubr.f32.gmra.mrb[0].mxu0 %v345
    %v347 = vpop.f32.mrb[0].mxu0
    %v348 = vadd.f32 %v274, %v347
    %v349 = vpop.f32.mrb[0].mxu0
    %350 = vdwg.mxu0
    %351 = vmatprep.subr.mxu0 0.0
    %v352 = vand.u32 %v49, 4294901760
    %v353 = vsub.f32 %v49, %v352
    %v354 = vand.u32 %v353, 4294901760
    %355 = vmatpush1.msra.mxu0 %v354
    %356 = vmatprep.subr.mxu0 0.0
    %357 = vmatpush1.msra.mxu0 0.0
    %358 = vmatprep.subr.mxu0 0.0
    %359 = vmatpush1.msra.mxu0 0.0
    %360 = vmatprep.subr.mxu0 0.0
    %361 = vmatpush1.msra.mxu0 0.0
    %362 = vmatprep.subr.mxu0 0.0
    %363 = vmatpush1.msra.mxu0 0.0
    %364 = vmatprep.subr.mxu0 0.0
    %365 = vmatpush1.msra.mxu0 0.0
    %366 = vmatprep.subr.mxu0 0.0
    %367 = vmatpush1.msra.mxu0 0.0
    %368 = vmatprep.subr.mxu0 0.0
    %369 = vmatpush1.msra.mxu0 0.0
    %370 = vmatprep.subr.mxu0 0.0
    %371 = vmatpush1.msra.mxu0 0.0
    %372 = vmatprep.subr.mxu0 0.0
    %373 = vmatpush1.msra.mxu0 0.0
    %374 = vmatprep.subr.mxu0 0.0
    %375 = vmatpush1.msra.mxu0 0.0
    %376 = vmatprep.subr.mxu0 0.0
    %377 = vmatpush1.msra.mxu0 0.0
    %378 = vmatprep.subr.mxu0 0.0
    %379 = vmatpush1.msra.mxu0 0.0
    %380 = vmatprep.subr.mxu0 0.0
    %381 = vmatpush1.msra.mxu0 0.0
    %382 = vmatprep.subr.mxu0 0.0
    %383 = vmatpush1.msra.mxu0 0.0
    %384 = vmatprep.subr.mxu0 0.0
    %385 = vmatpush1.msra.mxu0 0.0
    %386 = vmatprep.subr.mxu0 0.0
    %387 = vmatpush1.msra.mxu0 0.0
    %388 = vmatprep.subr.mxu0 0.0
    %389 = vmatpush1.msra.mxu0 0.0
    %390 = vmatprep.subr.mxu0 0.0
    %391 = vmatpush1.msra.mxu0 0.0
    %392 = vmatprep.subr.mxu0 0.0
    %393 = vmatpush1.msra.mxu0 0.0
    %394 = vmatprep.subr.mxu0 0.0
    %395 = vmatpush1.msra.mxu0 0.0
    %396 = vmatprep.subr.mxu0 0.0
    %397 = vmatpush1.msra.mxu0 0.0
    %398 = vmatprep.subr.mxu0 0.0
    %399 = vmatpush1.msra.mxu0 0.0
    %400 = vmatprep.subr.mxu0 0.0
    %401 = vmatpush1.msra.mxu0 0.0
    %402 = vmatprep.subr.mxu0 0.0
    %403 = vmatpush1.msra.mxu0 0.0
    %404 = vmatprep.subr.mxu0 0.0
    %405 = vmatpush1.msra.mxu0 0.0
    %406 = vmatprep.subr.mxu0 0.0
    %407 = vmatpush1.msra.mxu0 0.0
    %408 = vmatprep.subr.mxu0 0.0
    %409 = vmatpush1.msra.mxu0 0.0
    %410 = vmatprep.subr.mxu0 0.0
    %411 = vmatpush1.msra.mxu0 0.0
    %412 = vmatprep.subr.mxu0 0.0
    %413 = vmatpush1.msra.mxu0 0.0
    %414 = vmatprep.subr.mxu0 0.0
    %415 = vmatpush1.msra.mxu0 0.0
    %416 = vmatprep.subr.mxu0 0.0
    %417 = vmatpush1.msra.mxu0 0.0
    %418 = vmatprep.mubr.f32.mxu0 0.0
    %v419 = vand.u32 %v45, 4294901760
    %420 = vmatmul.mubr.f32.gmra.mrb[0].mxu0 %v419
    %v421 = vpop.f32.mrb[0].mxu0
    %v422 = vadd.f32 %v348, %v421
    %v423 = vpop.f32.mrb[0].mxu0
    %424 = vdwg.mxu0
    %425 = vmatprep.subr.mxu0 0.0
    %v426 = vand.u32 %v49, 4294901760
    %427 = vmatpush1.msra.mxu0 %v426
    %428 = vmatprep.subr.mxu0 0.0
    %429 = vmatpush1.msra.mxu0 0.0
    %430 = vmatprep.subr.mxu0 0.0
    %431 = vmatpush1.msra.mxu0 0.0
    %432 = vmatprep.subr.mxu0 0.0
    %433 = vmatpush1.msra.mxu0 0.0
    %434 = vmatprep.subr.mxu0 0.0
    %435 = vmatpush1.msra.mxu0 0.0
    %436 = vmatprep.subr.mxu0 0.0
    %437 = vmatpush1.msra.mxu0 0.0
    %438 = vmatprep.subr.mxu0 0.0
    %439 = vmatpush1.msra.mxu0 0.0
    %440 = vmatprep.subr.mxu0 0.0
    %441 = vmatpush1.msra.mxu0 0.0
    %442 = vmatprep.subr.mxu0 0.0
    %443 = vmatpush1.msra.mxu0 0.0
    %444 = vmatprep.subr.mxu0 0.0
    %445 = vmatpush1.msra.mxu0 0.0
    %446 = vmatprep.subr.mxu0 0.0
    %447 = vmatpush1.msra.mxu0 0.0
    %448 = vmatprep.subr.mxu0 0.0
    %449 = vmatpush1.msra.mxu0 0.0
    %450 = vmatprep.subr.mxu0 0.0
    %451 = vmatpush1.msra.mxu0 0.0
    %452 = vmatprep.subr.mxu0 0.0
    %453 = vmatpush1.msra.mxu0 0.0
    %454 = vmatprep.subr.mxu0 0.0
    %455 = vmatpush1.msra.mxu0 0.0
    %456 = vmatprep.subr.mxu0 0.0
    %457 = vmatpush1.msra.mxu0 0.0
    %458 = vmatprep.subr.mxu0 0.0
    %459 = vmatpush1.msra.mxu0 0.0
    %460 = vmatprep.subr.mxu0 0.0
    %461 = vmatpush1.msra.mxu0 0.0
    %462 = vmatprep.subr.mxu0 0.0
    %463 = vmatpush1.msra.mxu0 0.0
    %464 = vmatprep.subr.mxu0 0.0
    %465 = vmatpush1.msra.mxu0 0.0
    %466 = vmatprep.subr.mxu0 0.0
    %467 = vmatpush1.msra.mxu0 0.0
    %468 = vmatprep.subr.mxu0 0.0
    %469 = vmatpush1.msra.mxu0 0.0
    %470 = vmatprep.subr.mxu0 0.0
    %471 = vmatpush1.msra.mxu0 0.0
    %472 = vmatprep.subr.mxu0 0.0
    %473 = vmatpush1.msra.mxu0 0.0
    %474 = vmatprep.subr.mxu0 0.0
    %475 = vmatpush1.msra.mxu0 0.0
    %476 = vmatprep.subr.mxu0 0.0
    %477 = vmatpush1.msra.mxu0 0.0
    %478 = vmatprep.subr.mxu0 0.0
    %479 = vmatpush1.msra.mxu0 0.0
    %480 = vmatprep.subr.mxu0 0.0
    %481 = vmatpush1.msra.mxu0 0.0
    %482 = vmatprep.subr.mxu0 0.0
    %483 = vmatpush1.msra.mxu0 0.0
    %484 = vmatprep.subr.mxu0 0.0
    %485 = vmatpush1.msra.mxu0 0.0
    %486 = vmatprep.subr.mxu0 0.0
    %487 = vmatpush1.msra.mxu0 0.0
    %488 = vmatprep.subr.mxu0 0.0
    %489 = vmatpush1.msra.mxu0 0.0
    %490 = vmatprep.mubr.f32.mxu0 0.0
    %v491 = vand.u32 %v45, 4294901760
    %492 = vmatmul.mubr.f32.gmra.mrb[0].mxu0 %v491
    %v493 = vpop.f32.mrb[0].mxu0
    %v494 = vadd.f32 %v422, %v493
    %v495 = vpop.f32.mrb[0].mxu0
    %496 = vdwg.mxu0
    %v497 = vld [vmem:[%s2] sm:$0x1]
    %v499 = vlaneseq
    %v500 = vshrl.u32 %v499, 7
    %v501 = vsub.s32 0, %v500
    %v502 = vrot.slane %v497, %v501
    %v504 = vsub.f32 %v494, %v502
    %vm505 = vcmp.gt.f32.partialorder %v504, 0.0
    %v506 = vsel %vm505, 1, 0
    %v507 = vcvt.s32.f32 %v506
    %v508 = vlaneseq
    %v509 = vand.u32 %v508, 127
    %vm510 = vcmp.lt.s32.totalorder %v509, 18
    %v511 = vsub.f32 1.0, %v507
    %v512 = vsel %vm510, %v507, %v511
    %vm513 = vcmask 31744
    %514 = vst.msk [vmem:[#allocation7] sm:$0xff] %vm513, %v39
    %v515 = vsub.f32 1.0, %v39
    %517 = vrot.lane.b32.xlu0 %v515, 4
    %v518 = vpop.permute.xlu0 %517
    %vm520 = vcmask 64544
    %521 = vst.msk [vmem:[#allocation7] sm:$0xff] %vm520, %v518
    %523 = vrot.lane.b32.xlu0 %v512, 8
    %v524 = vpop.permute.xlu0 %523
    %vm526 = vcmask 359488
    %527 = vst.msk [vmem:[#allocation7] sm:$0xff] %vm526, %v524
    // Predicated region
    $region22: #{_binarize_forward.1} parent=1 // pred_check
      _
    $region23: #{_binarize_forward.1} parent=1 // pred_check_branch
      %529 = sbr.rel (0) target = $region25
    $region24: #{_binarize_forward.1} parent=1 // pred_region
      %s531 = ssub.s32 128, 128
      %532 = vsyncadd [#allocation4], %s531
      %s534 = sshll.u32 [#allocation7], 4
      %s535 = int_to_ptr.vmem [resolvable:$true] %s534
      %537 = dma.vmem_to_hbm [thread:$0]  %s535, 128, %s3, [#allocation4]
    $region25: #{_binarize_forward.1} parent=1 // pred_fallthru
      _
    // Predicated region
    $region26: #{_binarize_forward.1} parent=1 // pred_check
      _
    $region27: #{_binarize_forward.1} parent=1 // pred_check_branch
      %539 = sbr.rel (0) target = $region29
    $region28: #{_binarize_forward.1} parent=1 // pred_region
      %540 = dma.done [#allocation4], 128
    $region29: #{_binarize_forward.1} parent=1 // pred_fallthru
      _
    %541 = vsyncpa [#allocation3], 1
    %542 = vsyncpa [#allocation6], 1
    %543 = vsyncpa [#allocation4], 1

</llo_original>
